<compile_context>
chip_gen: v7x
topology: tpu7x:2x2x1
jax: 0.10.0
libtpu: 0.0.40
codegen_flags: <defaults>
</compile_context>

<pallas_src>
import jax
import jax.numpy as jnp
from jax.experimental import pallas as pl
from jax.experimental.pallas import tpu as pltpu


def _round_up(n, m):
    return ((n + m - 1) // m) * m


def nsp_kernel(x_ref, w1_ref, b1_ref, w2t_ref, b2_ref, o_ref):
    """One batch tile: Linear(num_inputs -> H) -> Tanh -> Linear(H -> 2)."""
    # In-kernel bf16 cast of X (hidden under the MXU), bf16 GEMM, f32 accumulation.
    x_bf = x_ref[...].astype(jnp.bfloat16)
    h = jnp.dot(x_bf, w1_ref[...], preferred_element_type=jnp.float32)
    h = jnp.tanh(h + b1_ref[...])  # f32 bias add (VPU) + tanh (EUP)

    # Second linear has only 2 output columns -> keep it off the (saturated) MXU:
    # broadcast-multiply + lane reduction on VPU/XLU, write each column directly.
    w2t = w2t_ref[...]  # (2, H) f32, rows lane-major
    o_ref[:, 0:1] = (
        jnp.sum(h * w2t[0:1, :], axis=-1, keepdims=True) + b2_ref[:, 0:1]
    ).astype(o_ref.dtype)
    o_ref[:, 1:2] = (
        jnp.sum(h * w2t[1:2, :], axis=-1, keepdims=True) + b2_ref[:, 1:2]
    ).astype(o_ref.dtype)


def prepare_params(w1, b1, w2, b2):
    """One-time parameter prep (do NOT call per forward):
    W1 -> bf16 (MXU RHS), W2 -> transposed (2, H) f32 lane-major, biases as (1, .)."""
    w1_bf = w1.astype(jnp.bfloat16)                     # (num_inputs, H)
    b1_r = jnp.reshape(b1, (1, -1)).astype(jnp.float32)  # (1, H)
    w2t = jnp.transpose(w2).astype(jnp.float32)          # (2, H)
    b2_r = jnp.reshape(b2, (1, -1)).astype(jnp.float32)  # (1, 2)
    return w1_bf, b1_r, w2t, b2_r


def next_sentence_pred(x, w1_bf, b1, w2t, b2, *, block_batch=1024):
    """x: (B, num_inputs) f32 -> (B, 2) f32 logits.

    w1_bf: (num_inputs, H) bf16, b1: (1, H) f32, w2t: (2, H) f32, b2: (1, 2) f32
    (as produced once by prepare_params).
    """
    B, num_inputs = x.shape
    num_hiddens = w1_bf.shape[1]
    out_dim = w2t.shape[0]

    # Batch tile: >=2 grid steps whenever B allows (megacore sharding on v7x),
    # 16-row aligned, never larger than the 8-aligned batch, capped at block_batch.
    tb = min(block_batch, _round_up(pl.cdiv(B, 2), 16))
    tb = max(8, min(tb, _round_up(B, 8)))
    grid = (pl.cdiv(B, tb),)

    # VMEM budget from actual buffer sizes (X tile double-buffered, weights
    # single-buffered, h intermediate), x2 + 4 MiB headroom, capped at 40 MiB.
    x_tile_bytes = tb * num_inputs * 4
    w1_bytes = num_inputs * num_hiddens * 2
    h_bytes = tb * num_hiddens * 4
    out_tile_bytes = tb * out_dim * 4
    small_bytes = (num_hiddens + out_dim * num_hiddens + out_dim) * 4
    need = 2 * x_tile_bytes + w1_bytes + h_bytes + 2 * out_tile_bytes + small_bytes
    vmem_limit = int(min(max(2 * need + (4 << 20), 16 << 20), 40 << 20))

    cost = pl.CostEstimate(
        flops=2 * B * num_inputs * num_hiddens + 2 * B * num_hiddens * out_dim,
        transcendentals=B * num_hiddens,
        bytes_accessed=(
            x.size * 4            # f32 X (cast to bf16 in-kernel)
            + w1_bf.size * 2      # bf16 W1 (resident)
            + (b1.size + w2t.size + b2.size) * 4
            + B * out_dim * 4     # f32 logits out
        ),
    )

    return pl.pallas_call(
        nsp_kernel,
        out_shape=jax.ShapeDtypeStruct((B, out_dim), jnp.float32),
        grid_spec=pl.GridSpec(
            grid=grid,
            in_specs=[
                # X: batch-tiled, double-buffered (default) -> DMA/compute overlap.
                pl.BlockSpec((tb, num_inputs), lambda i: (i, 0)),
                # Grid-invariant weights/biases: single-buffered VMEM residents.
                pl.BlockSpec((num_inputs, num_hiddens), lambda i: (0, 0),
                             pipeline_mode=pl.Buffered(1)),
                pl.BlockSpec((1, num_hiddens), lambda i: (0, 0),
                             pipeline_mode=pl.Buffered(1)),
                pl.BlockSpec((out_dim, num_hiddens), lambda i: (0, 0),
                             pipeline_mode=pl.Buffered(1)),
                pl.BlockSpec((1, out_dim), lambda i: (0, 0),
                             pipeline_mode=pl.Buffered(1)),
            ],
            out_specs=pl.BlockSpec((tb, out_dim), lambda i: (i, 0)),
        ),
        compiler_params=pltpu.CompilerParams(
            dimension_semantics=("parallel",),   # shard batch tiles across TCs on v7x
            vmem_limit_bytes=vmem_limit,
        ),
        cost_estimate=cost,
    )(x, w1_bf, b1, w2t, b2)


def init_params(key, num_inputs, num_hiddens):
    """Deterministic init mimicking PyTorch nn.Linear default (U[-1/sqrt(fan_in), ...])."""
    k1, k2, k3, k4 = jax.random.split(key, 4)
    bound1 = 1.0 / jnp.sqrt(num_inputs)
    bound2 = 1.0 / jnp.sqrt(num_hiddens)
    # Stored already transposed relative to torch's (out, in) convention.
    w1 = jax.random.uniform(k1, (num_inputs, num_hiddens), jnp.float32, -bound1, bound1)
    b1 = jax.random.uniform(k2, (1, num_hiddens), jnp.float32, -bound1, bound1)
    w2 = jax.random.uniform(k3, (num_hiddens, 2), jnp.float32, -bound2, bound2)
    b2 = jax.random.uniform(k4, (1, 2), jnp.float32, -bound2, bound2)
    return w1, b1, w2, b2


if __name__ == "__main__":
    # Small shapes consistent with the module's forward: X = pooler_output (batch, num_inputs).
    batch = 8
    num_inputs = 32
    num_hiddens = 32

    key = jax.random.PRNGKey(0)
    kx, kp = jax.random.split(key)
    x = jax.random.normal(kx, (batch, num_inputs), jnp.float32)
    w1, b1, w2, b2 = init_params(kp, num_inputs, num_hiddens)

    # One-time parameter prep (bf16 W1, transposed W2) -- not on the per-call path.
    w1_bf, b1_r, w2t, b2_r = prepare_params(w1, b1, w2, b2)

    out = next_sentence_pred(x, w1_bf, b1_r, w2t, b2_r)
    out = jax.block_until_ready(out)

    # Reference check in plain JAX (same math as the PyTorch module, full f32).
    ref = jnp.tanh(x @ w1 + b1) @ w2 + b2
    assert out.shape == (batch, 2)
    # bf16 X/W1 on the first matmul (f32 accumulation) -> slightly looser tolerance.
    assert jnp.allclose(out, ref, atol=2e-2, rtol=2e-2)

    print("KERNEL_OK")
</pallas_src>

<mosaic_0001>
module attributes {stable_mosaic.version = 11 : i64} {
  func.func @nsp_kernel(%arg0: i32, %arg1: memref<8x32xf32, #tpu.memory_space<vmem>>, %arg2: memref<32x32xbf16, #tpu.memory_space<vmem>>, %arg3: memref<1x32xf32, #tpu.memory_space<vmem>>, %arg4: memref<2x32xf32, #tpu.memory_space<vmem>>, %arg5: memref<1x2xf32, #tpu.memory_space<vmem>>, %arg6: memref<8x2xf32, #tpu.memory_space<vmem>>) attributes {dimension_semantics = [#tpu.dimension_semantics<parallel>], iteration_bounds = array<i64: 1>, scalar_prefetch = 0 : i64, scratch_operands = 0 : i64, tpu.core_type = #tpu.core_type<tc>, window_params = [{transform_indices = @transform_0, window_bounds = array<i64: 8, 32>}, {pipeline_mode = #tpu.pipeline_mode<synchronous>, transform_indices = @transform_1, window_bounds = array<i64: 32, 32>}, {pipeline_mode = #tpu.pipeline_mode<synchronous>, transform_indices = @transform_2, window_bounds = array<i64: 1, 32>}, {pipeline_mode = #tpu.pipeline_mode<synchronous>, transform_indices = @transform_3, window_bounds = array<i64: 2, 32>}, {pipeline_mode = #tpu.pipeline_mode<synchronous>, transform_indices = @transform_4, window_bounds = array<i64: 1, 2>}, {transform_indices = @transform_5, window_bounds = array<i64: 8, 2>}]} {
    %c0 = arith.constant 0 : index
    %c0_0 = arith.constant 0 : index
    %0 = vector.load %arg1[%c0, %c0_0] : memref<8x32xf32, #tpu.memory_space<vmem>>, vector<8x32xf32>
    %1 = arith.truncf %0 : vector<8x32xf32> to vector<8x32xbf16>
    %c0_1 = arith.constant 0 : index
    %c0_2 = arith.constant 0 : index
    %2 = vector.load %arg2[%c0_1, %c0_2] : memref<32x32xbf16, #tpu.memory_space<vmem>>, vector<32x32xbf16>
    %cst = arith.constant dense<0.000000e+00> : vector<8x32xf32>
    %3 = tpu.matmul %1, %2, %cst {dimension_numbers = #tpu.dot_dimension_numbers<[1], [0], [0], [1], [0, 0, 1, 1], [], []>} : vector<8x32xbf16>, vector<32x32xbf16>, vector<8x32xf32> -> vector<8x32xf32>
    %c0_3 = arith.constant 0 : index
    %c0_4 = arith.constant 0 : index
    %4 = vector.load %arg3[%c0_3, %c0_4] : memref<1x32xf32, #tpu.memory_space<vmem>>, vector<1x32xf32>
    %5 = vector.broadcast %4 : vector<1x32xf32> to vector<8x32xf32>
    %6 = arith.addf %3, %5 : vector<8x32xf32>
    %7 = math.tanh %6 : vector<8x32xf32>
    %c0_5 = arith.constant 0 : index
    %c0_6 = arith.constant 0 : index
    %8 = vector.load %arg4[%c0_5, %c0_6] : memref<2x32xf32, #tpu.memory_space<vmem>>, vector<2x32xf32>
    %9 = vector.extract_strided_slice %8 {offsets = [0, 0], sizes = [1, 32], strides = [1, 1]} : vector<2x32xf32> to vector<1x32xf32>
    %10 = vector.broadcast %9 : vector<1x32xf32> to vector<8x32xf32>
    %11 = arith.mulf %7, %10 : vector<8x32xf32>
    %cst_7 = arith.constant dense<0.000000e+00> : vector<8xf32>
    %12 = vector.multi_reduction <add>, %11, %cst_7 [1] : vector<8x32xf32> to vector<8xf32>
    %13 = vector.shape_cast %12 : vector<8xf32> to vector<8x1xf32>
    %c0_8 = arith.constant 0 : index
    %c0_9 = arith.constant 0 : index
    %14 = vector.load %arg5[%c0_8, %c0_9] : memref<1x2xf32, #tpu.memory_space<vmem>>, vector<1x1xf32>
    %15 = vector.broadcast %14 : vector<1x1xf32> to vector<8x1xf32>
    %16 = arith.addf %13, %15 : vector<8x1xf32>
    %c0_10 = arith.constant 0 : index
    %c0_11 = arith.constant 0 : index
    %17 = vector.load %arg6[%c0_10, %c0_11] : memref<8x2xf32, #tpu.memory_space<vmem>>, vector<8x1xf32>
    tpu.vector_store %arg6[%c0_10, %c0_11], %16 {strides = array<i32>} : memref<8x2xf32, #tpu.memory_space<vmem>>, vector<8x1xf32>,
    %18 = vector.extract_strided_slice %8 {offsets = [1, 0], sizes = [1, 32], strides = [1, 1]} : vector<2x32xf32> to vector<1x32xf32>
    %19 = vector.broadcast %18 : vector<1x32xf32> to vector<8x32xf32>
    %20 = arith.mulf %7, %19 : vector<8x32xf32>
    %cst_12 = arith.constant dense<0.000000e+00> : vector<8xf32>
    %21 = vector.multi_reduction <add>, %20, %cst_12 [1] : vector<8x32xf32> to vector<8xf32>
    %22 = vector.shape_cast %21 : vector<8xf32> to vector<8x1xf32>
    %c0_13 = arith.constant 0 : index
    %c1 = arith.constant 1 : index
    %23 = vector.load %arg5[%c0_13, %c1] : memref<1x2xf32, #tpu.memory_space<vmem>>, vector<1x1xf32>
    %24 = vector.broadcast %23 : vector<1x1xf32> to vector<8x1xf32>
    %25 = arith.addf %22, %24 : vector<8x1xf32>
    %c0_14 = arith.constant 0 : index
    %c1_15 = arith.constant 1 : index
    %26 = vector.load %arg6[%c0_14, %c1_15] : memref<8x2xf32, #tpu.memory_space<vmem>>, vector<8x1xf32>
    tpu.vector_store %arg6[%c0_14, %c1_15], %25 {strides = array<i32>} : memref<8x2xf32, #tpu.memory_space<vmem>>, vector<8x1xf32>,
    return
  }
  func.func @transform_0(%arg0: i32) -> (i32, i32) {
    %c0_i32 = arith.constant 0 : i32
    %c0_i32_0 = arith.constant 0 : i32
    return %arg0, %c0_i32 : i32, i32
  }
  func.func @transform_1(%arg0: i32) -> (i32, i32) {
    %c0_i32 = arith.constant 0 : i32
    %c0_i32_0 = arith.constant 0 : i32
    %c0_i32_1 = arith.constant 0 : i32
    return %c0_i32, %c0_i32_0 : i32, i32
  }
  func.func @transform_2(%arg0: i32) -> (i32, i32) {
    %c0_i32 = arith.constant 0 : i32
    %c0_i32_0 = arith.constant 0 : i32
    %c0_i32_1 = arith.constant 0 : i32
    return %c0_i32, %c0_i32_0 : i32, i32
  }
  func.func @transform_3(%arg0: i32) -> (i32, i32) {
    %c0_i32 = arith.constant 0 : i32
    %c0_i32_0 = arith.constant 0 : i32
    %c0_i32_1 = arith.constant 0 : i32
    return %c0_i32, %c0_i32_0 : i32, i32
  }
  func.func @transform_4(%arg0: i32) -> (i32, i32) {
    %c0_i32 = arith.constant 0 : i32
    %c0_i32_0 = arith.constant 0 : i32
    %c0_i32_1 = arith.constant 0 : i32
    return %c0_i32, %c0_i32_0 : i32, i32
  }
  func.func @transform_5(%arg0: i32) -> (i32, i32) {
    %c0_i32 = arith.constant 0 : i32
    %c0_i32_0 = arith.constant 0 : i32
    return %arg0, %c0_i32 : i32, i32
  }
}

</mosaic_0001>

<llo_original>
// kernel: tpu_custom_call.1
$region0: #{tpu_custom_call.1}
  #allocation0 [shape = 'u32[]', space=smem, size = 0x4, offset = 0x4, fixed_abs, tag = 'smem constant byte address 0x4 - core index']
  #allocation1 [shape = 'u32[144,128]{1,0:T(1,128)}', space=vmem, size = 0x12000, scoped, tag = 'internal scratch']
  %s0 = inlined_call_operand.hbm [shape: f32[8,32], index: 0, kind: input, shape index: {}]
  %s1 = inlined_call_operand.hbm [shape: bf16[32,32], index: 1, kind: input, shape index: {}]
  %s2 = inlined_call_operand.vmem [shape: f32[1,32], index: 2, kind: input, shape index: {}]
  %s3 = inlined_call_operand.vmem [shape: f32[2,32], index: 3, kind: input, shape index: {}]
  %s4 = inlined_call_operand.vmem [shape: f32[1,2], index: 4, kind: input, shape index: {}]
  %s5 = inlined_call_operand.vmem [shape: f32[8,2], index: 5, kind: output, shape index: {}]
  %s6 = sld [smem:[#allocation0]]
  $region38: #{tpu_custom_call.1} parent=0
    _
  %s8 = ssub.s32 1, %s6
  %s9 = scalar_select 0, %s8, %s6
  $region1: #{tpu_custom_call.1} parent=0
    #allocation2 [shape = 'u8[4096]{0}', space=vmem, size = 0x1000, scoped, tag = 'input window, operand 0, single buffered']
    #allocation3 [shape = 's32[1]{0}', space=sflag, size = 0x4, scoped, tag = 'scoped memory for tpu_custom_call.1']
    #allocation4 [shape = 'u8[8192]{0}', space=vmem, size = 0x2000, scoped, tag = 'input window, operand 1, single buffered']
    #allocation5 [shape = 's32[1]{0}', space=sflag, size = 0x4, scoped, tag = 'scoped memory for tpu_custom_call.1']
    %10 = vsyncpa [#allocation3], 0
    %11 = vsyncpa [#allocation5], 0
    // Predicated region
    $region2: #{tpu_custom_call.1} parent=1 // pred_check
      _
    $region3: #{tpu_custom_call.1} parent=1 // pred_check_branch
      %13 = sbr.rel (0) target = $region5
    $region4: #{tpu_custom_call.1} parent=1 // pred_region
      %s15 = ssub.s32 128, 128
      %16 = vsyncadd [#allocation3], %s15
      %s18 = sshll.u32 [#allocation2], 4
      %s19 = int_to_ptr.vmem [resolvable:$true] %s18
      %21 = dma.hbm_to_vmem [thread:$0]  %s0, 128, %s19, [#allocation3]
    $region5: #{tpu_custom_call.1} parent=1 // pred_fallthru
      _
    // Predicated region
    $region6: #{tpu_custom_call.1} parent=1 // pred_check
      _
    $region7: #{tpu_custom_call.1} parent=1 // pred_check_branch
      %23 = sbr.rel (0) target = $region9
    $region8: #{tpu_custom_call.1} parent=1 // pred_region
      %s25 = ssub.s32 256, 256
      %26 = vsyncadd [#allocation5], %s25
      %s27 = sshll.u32 [#allocation4], 4
      %s28 = int_to_ptr.vmem [resolvable:$true] %s27
      %33 = dma.hbm_to_vmem [thread:$0]  %s1, 256, %s28, [#allocation5], 64, 64, 4
    $region9: #{tpu_custom_call.1} parent=1 // pred_fallthru
      _
    // Predicated region
    $region10: #{tpu_custom_call.1} parent=1 // pred_check
      _
    $region11: #{tpu_custom_call.1} parent=1 // pred_check_branch
      %35 = sbr.rel (0) target = $region13
    $region12: #{tpu_custom_call.1} parent=1 // pred_region
      _
    $region13: #{tpu_custom_call.1} parent=1 // pred_fallthru
      _
    // Predicated region
    $region14: #{tpu_custom_call.1} parent=1 // pred_check
      _
    $region15: #{tpu_custom_call.1} parent=1 // pred_check_branch
      %37 = sbr.rel (0) target = $region17
    $region16: #{tpu_custom_call.1} parent=1 // pred_region
      _
    $region17: #{tpu_custom_call.1} parent=1 // pred_fallthru
      _
    // Predicated region
    $region18: #{tpu_custom_call.1} parent=1 // pred_check
      _
    $region19: #{tpu_custom_call.1} parent=1 // pred_check_branch
      %39 = sbr.rel (0) target = $region21
    $region20: #{tpu_custom_call.1} parent=1 // pred_region
      _
    $region21: #{tpu_custom_call.1} parent=1 // pred_fallthru
      _
    // Predicated region
    $region22: #{tpu_custom_call.1} parent=1 // pred_check
      _
    $region23: #{tpu_custom_call.1} parent=1 // pred_check_branch
      %41 = sbr.rel (0) target = $region25
    $region24: #{tpu_custom_call.1} parent=1 // pred_region
      %42 = dma.done [#allocation3], 128
    $region25: #{tpu_custom_call.1} parent=1 // pred_fallthru
      _
    // Predicated region
    $region26: #{tpu_custom_call.1} parent=1 // pred_check
      _
    $region27: #{tpu_custom_call.1} parent=1 // pred_check_branch
      %44 = sbr.rel (0) target = $region29
    $region28: #{tpu_custom_call.1} parent=1 // pred_region
      %45 = dma.done [#allocation5], 256
    $region29: #{tpu_custom_call.1} parent=1 // pred_fallthru
      _
    %v47 = vld [vmem:[#allocation2] sm:$0xff]
    %v48 = vpack.c.bf16 %v47, %v47
    %v49 = vld [vmem:[#allocation4] sm:$0xf]
    %v50 = vld [vmem:[#allocation4 + $0x4] sm:$0xf]
    %v51 = vld [vmem:[#allocation4 + $0x8] sm:$0xf]
    %v52 = vld [vmem:[#allocation4 + $0xc] sm:$0xf]
    %v53 = vld [vmem:[%s2] sm:$0x1]
    %v55 = vlaneseq
    %v56 = vshrl.u32 %v55, 7
    %v57 = vsub.s32 0, %v56
    %v58 = vrot.slane %v53, %v57
    %v64 = vunpack.c.l.b16 %v49
    %v65 = vunpack.c.l.b16 %v50
    %v66 = vunpack.c.l.b16 %v51
    %v67 = vunpack.c.l.b16 %v52
    %v68 = vpack.c.b16 %v65, %v64
    %v69 = vpack.c.b16 %v67, %v66
    %vm72 = vcmask 261120
    %v74 = vsel %vm72, %v48, 0
    %76 = vmatprep.subr.bf16.mxu0 0
    %77 = vmatpush1.bf16.msra.mxu0 %v68
    %78 = vmatprep.subr.bf16.mxu0 0
    %79 = vmatpush1.bf16.msra.mxu0 %v69
    %80 = vmatprep.subr.bf16.mxu0 0
    %81 = vmatpush1.bf16.msra.mxu0 0
    %82 = vmatprep.subr.bf16.mxu0 0
    %83 = vmatpush1.bf16.msra.mxu0 0
    %84 = vmatprep.subr.bf16.mxu0 0
    %85 = vmatpush1.bf16.msra.mxu0 0
    %86 = vmatprep.subr.bf16.mxu0 0
    %87 = vmatpush1.bf16.msra.mxu0 0
    %88 = vmatprep.subr.bf16.mxu0 0
    %89 = vmatpush1.bf16.msra.mxu0 0
    %90 = vmatprep.subr.bf16.mxu0 0
    %91 = vmatpush1.bf16.msra.mxu0 0
    %92 = vmatprep.subr.bf16.mxu0 0
    %93 = vmatpush1.bf16.msra.mxu0 0
    %94 = vmatprep.subr.bf16.mxu0 0
    %95 = vmatpush1.bf16.msra.mxu0 0
    %96 = vmatprep.subr.bf16.mxu0 0
    %97 = vmatpush1.bf16.msra.mxu0 0
    %98 = vmatprep.subr.bf16.mxu0 0
    %99 = vmatpush1.bf16.msra.mxu0 0
    %100 = vmatprep.subr.bf16.mxu0 0
    %101 = vmatpush1.bf16.msra.mxu0 0
    %102 = vmatprep.subr.bf16.mxu0 0
    %103 = vmatpush1.bf16.msra.mxu0 0
    %104 = vmatprep.subr.bf16.mxu0 0
    %105 = vmatpush1.bf16.msra.mxu0 0
    %106 = vmatprep.subr.bf16.mxu0 0
    %107 = vmatpush1.bf16.msra.mxu0 0
    %108 = vmatprep.mubr.bf16.mxu0 0
    %109 = vmatmul.mubr.bf16.gmra.mrb[0].mxu0 %v74
    %v110 = vpop.f32.mrb[0].mxu0
    %v111 = vadd.f32 %v58, %v110
    %v112 = vpop.f32.mrb[0].mxu0
    %v113 = vpop.f32.mrb[0].mxu0
    %v114 = vpop.f32.mrb[0].mxu0
    %115 = vdwg.mxu0
    %v116 = vtanh.pop %v111
    %v117 = vld [vmem:[%s3] sm:$0x3]
    %v118 = vlaneseq
    %v119 = vshrl.u32 %v118, 7
    %v120 = vsub.s32 0, %v119
    %v121 = vrot.slane %v117, %v120
    %v122 = vmul.f32 %v116, %v121
    %v123 = vsel %vm72, %v122, 0.0
    %124 = vadd.xlane.f32.xlu0 %v123
    %v125 = vpop.xlane.xlu0 %124
    %v126 = vld [vmem:[%s4] sm:$0x1]
    %v128 = vlaneseq
    %v129 = vshrl.u32 %v128, 7
    %v130 = vsub.s32 0, %v129
    %v131 = vrot.slane %v126, %v130
    %v133 = vadd.f32 %v125, %v131
    %vm134 = vcmask 7168
    %135 = vst.msk [vmem:[%s5] sm:$0xff] %vm134, %v133
    %v136 = vlaneseq
    %v137 = vshrl.u32 %v136, 7
    %v138 = vsub.s32 1, %v137
    %v139 = vrot.slane %v117, %v138
    %v140 = vmul.f32 %v116, %v139
    %v141 = vsel %vm72, %v140, 0.0
    %142 = vadd.xlane.f32.xlu0 %v141
    %v143 = vpop.xlane.xlu0 %142
    %v144 = vld [vmem:[%s4] sm:$0x1]
    %v146 = vlaneseq
    %v147 = vshrl.u32 %v146, 7
    %v148 = vsub.s32 0, %v147
    %v149 = vrot.slane %v144, %v148
    %v151 = vadd.f32 %v143, %v149
    %vm152 = vcmask 15368
    %153 = vst.msk [vmem:[%s5] sm:$0xff] %vm152, %v151
    // Predicated region
    $region30: #{tpu_custom_call.1} parent=1 // pred_check
      _
    $region31: #{tpu_custom_call.1} parent=1 // pred_check_branch
      %155 = sbr.rel (0) target = $region33
    $region32: #{tpu_custom_call.1} parent=1 // pred_region
      _
    $region33: #{tpu_custom_call.1} parent=1 // pred_fallthru
      _
    // Predicated region
    $region34: #{tpu_custom_call.1} parent=1 // pred_check
      _
    $region35: #{tpu_custom_call.1} parent=1 // pred_check_branch
      %157 = sbr.rel (0) target = $region37
    $region36: #{tpu_custom_call.1} parent=1 // pred_region
      _
    $region37: #{tpu_custom_call.1} parent=1 // pred_fallthru
      _
    %158 = vsyncpa [#allocation3], 1
    %159 = vsyncpa [#allocation5], 1

</llo_original>
